<compile_context>
chip_gen: v7x
topology: tpu7x:2x2x1
jax: 0.10.0
libtpu: 0.0.40
codegen_flags: <defaults>
</compile_context>

<pallas_src>
import math

import jax
import jax.numpy as jnp
import numpy as np
from jax.experimental import pallas as pl
from jax.experimental.pallas import tpu as pltpu


def _round_up(x, m):
    return ((x + m - 1) // m) * m


def _tpu_budget():
    """Returns (vmem_limit_bytes, default_max_batch_tile, multi_core_hint)."""
    cap = 64 * 1024 * 1024
    try:
        info = pltpu.get_tpu_info()
        cap = int(getattr(info, "vmem_capacity_bytes", cap))
    except Exception:
        pass
    if cap >= 100 * 1024 * 1024:
        # v5e / v6e: 128 MiB VMEM, single TensorCore per chip.
        return 64 * 1024 * 1024, 2048, False
    # v7x (or unknown/conservative): 64 MiB VMEM per TensorCore, 2 TCs/chip.
    return 40 * 1024 * 1024, 1024, True


def qgcn_last_layer_kernel(a_ref, x0_ref, x1_ref, wtexp_ref, wsexp_ref,
                           wout_ref, bl_ref, br_ref, out_ref):
    f32 = jnp.float32
    mxu_dt = wtexp_ref.dtype   # bf16 (default) or f32; f32 accumulation always

    # t_exp[b, m*N+n] = t[b, m] = sum_l x1[b, m, l] * wl[l]
    #   one lane-dense (TB, N*L) @ (N*L, N*N) MXU matmul (W_texp embeds wl and
    #   broadcasts t[m] across the N lanes of row m of A's flattened layout).
    t_exp = jnp.dot(x1_ref[...], wtexp_ref[...], preferred_element_type=f32)

    # prod_a[b, m*N+n] = A[b, m, n] * t[b, m]        (fully lane-dense VPU mul)
    prod_a = a_ref[...].astype(f32) * t_exp

    # s_exp[b, n*R+r] = s[b, n] = sum_m A[b, m, n] * t[b, m] + b_left
    #   (TB, N*N) @ (N*N, N*R) 0/1 segment-sum+broadcast matrix on the MXU.
    s_exp = jnp.dot(prod_a.astype(mxu_dt), wsexp_ref[...],
                    preferred_element_type=f32) + bl_ref[0, 0]

    # prod_x0[b, n*R+r] = x0[b, n, r] * s[b, n]       (lane-dense VPU mul)
    prod_x0 = x0_ref[...].astype(f32) * s_exp

    # out[b, o] = sum_{n,r} x0[b,n,r] * s[b,n] * w_right[o,r] + b_right[o]
    #   W_out = tile(w_right^T, N) fuses the n-reduction with the final
    #   projection in a single (TB, N*R) @ (N*R, O) MXU matmul.
    out = jnp.dot(prod_x0.astype(mxu_dt), wout_ref[...],
                  preferred_element_type=f32) + br_ref[...]
    out_ref[...] = out.astype(out_ref.dtype)


def qgcn_last_layer(A, x0, x1, w_left, b_left, w_right, b_right, *,
                    stream_dtype=jnp.bfloat16, max_batch_tile=None):
    B, N, _ = A.shape
    R = x0.shape[-1]
    L = x1.shape[-1]
    O = w_right.shape[0]

    vmem_limit, default_tile, multi_core = _tpu_budget()
    if max_batch_tile is None:
        max_batch_tile = default_tile

    # Batch tile: multiple of 8 (sublane-aligned rows), as large as the VMEM
    # budget allows; on v7x keep >=2 grid steps so both TensorCores get work.
    TB = min(_round_up(B, 8), _round_up(max_batch_tile, 8))
    if multi_core:
        TB = min(TB, max(8, _round_up(pl.cdiv(B, 2), 8)))
    Bp = _round_up(B, TB)

    # Lane-dense 2D streaming layout (free metadata reshape on contiguous
    # arrays): each DMA'd row is N*N / N*R / N*L contiguous elements.
    # Padded batch rows evaluate to b_right and are sliced off below.
    a_f = A.astype(stream_dtype).reshape(B, N * N)
    x0_f = x0.astype(stream_dtype).reshape(B, N * R)
    x1_f = x1.astype(stream_dtype).reshape(B, N * L)
    if Bp != B:
        pad = Bp - B
        a_f = jnp.pad(a_f, ((0, pad), (0, 0)))
        x0_f = jnp.pad(x0_f, ((0, pad), (0, 0)))
        x1_f = jnp.pad(x1_f, ((0, pad), (0, 0)))

    wl = w_left.reshape(L).astype(jnp.float32)
    wrt = jnp.transpose(w_right).astype(jnp.float32)            # (R, O)

    # Constant contraction matrices (tiny, built once in the wrapper):
    #   W_texp[m*L+l, m'*N+n] = wl[l] * (m == m')   -> t_exp  = x1_flat @ W_texp
    #   W_sexp[m*N+n, n'*R+r] = (n == n')           -> s_exp  = (A*t_exp) @ W_sexp
    #   W_out [n*R+r, o]      = w_right[o, r]       -> out    = (x0*s_exp) @ W_out
    eye_n = jnp.eye(N, dtype=jnp.float32)
    w_texp = jnp.kron(eye_n, wl[:, None] * jnp.ones((1, N), jnp.float32))
    w_sexp = jnp.tile(jnp.kron(eye_n, jnp.ones((1, R), jnp.float32)), (N, 1))
    w_out = jnp.tile(wrt, (N, 1))
    w_texp = w_texp.astype(stream_dtype)
    w_sexp = w_sexp.astype(stream_dtype)
    w_out = w_out.astype(stream_dtype)

    bl = b_left.reshape(1, 1).astype(jnp.float32)               # SMEM scalar
    br = b_right.reshape(1, O).astype(jnp.float32)

    out = pl.pallas_call(
        qgcn_last_layer_kernel,
        out_shape=jax.ShapeDtypeStruct((Bp, O), jnp.float32),
        grid=(Bp // TB,),
        in_specs=[
            pl.BlockSpec((TB, N * N), lambda b: (b, 0)),          # A flat
            pl.BlockSpec((TB, N * R), lambda b: (b, 0)),          # x0 flat
            pl.BlockSpec((TB, N * L), lambda b: (b, 0)),          # x1 flat
            pl.BlockSpec((N * L, N * N), lambda b: (0, 0)),       # W_texp
            pl.BlockSpec((N * N, N * R), lambda b: (0, 0)),       # W_sexp
            pl.BlockSpec((N * R, O), lambda b: (0, 0)),           # W_out
            pl.BlockSpec(memory_space=pltpu.MemorySpace.SMEM),    # b_left
            pl.BlockSpec((1, O), lambda b: (0, 0)),               # b_right
        ],
        # (TB, O) output: O=6 < 128 lanes -> masked stores, but writeback is
        # ~2% of the input stream, so batch-major output is kept.
        out_specs=pl.BlockSpec((TB, O), lambda b: (b, 0)),
        compiler_params=pltpu.CompilerParams(
            dimension_semantics=("parallel",),
            vmem_limit_bytes=vmem_limit),
    )(a_f, x0_f, x1_f, w_texp, w_sexp, w_out, bl, br)
    return out[:B]


def qgcn_last_layer_ref(A, x0, x1, w_left, b_left, w_right, b_right):
    """Pure-JAX mirror of the PyTorch forward (for validation)."""
    x1_A = jnp.matmul(jnp.transpose(x1, (0, 2, 1)), A)                   # (B, L, N)
    W2 = jnp.matmul(jnp.transpose(x1_A, (0, 2, 1)), w_left.T) + b_left   # (B, N, 1)
    u = jnp.matmul(jnp.transpose(W2, (0, 2, 1)), x0)                     # (B, 1, R)
    o = jnp.matmul(u, w_right.T) + b_right                               # (B, 1, O)
    return jnp.squeeze(o, axis=1)


if __name__ == "__main__":
    B, N = 2, 16          # batch, number of nodes
    L, R, O = 8, 12, 6    # left_in_dim, right_in_dim, out_dim

    key = jax.random.PRNGKey(0)
    kA, kx0, kx1, kwl, kbl, kwr, kbr = jax.random.split(key, 7)

    A = jax.random.normal(kA, (B, N, N), dtype=jnp.float32)
    x0 = jax.random.normal(kx0, (B, N, R), dtype=jnp.float32)
    x1 = jax.random.normal(kx1, (B, N, L), dtype=jnp.float32)

    # Deterministic parameter init matching the module's init ranges.
    stdv_l = 1.0 / math.sqrt(1.0)
    w_left = jax.random.uniform(kwl, (1, L), jnp.float32, -stdv_l, stdv_l)
    b_left = jax.random.uniform(kbl, (1,), jnp.float32,
                                -1.0 / math.sqrt(L), 1.0 / math.sqrt(L))
    stdv_r = 1.0 / math.sqrt(O)
    w_right = jax.random.uniform(kwr, (O, R), jnp.float32, -stdv_r, stdv_r)
    b_right = jax.random.uniform(kbr, (O,), jnp.float32,
                                 -1.0 / math.sqrt(R), 1.0 / math.sqrt(R))

    ref = qgcn_last_layer_ref(A, x0, x1, w_left, b_left, w_right, b_right)

    # 1) f32 streaming path: tight match against the f32 reference.
    out_f32 = qgcn_last_layer(A, x0, x1, w_left, b_left, w_right, b_right,
                              stream_dtype=jnp.float32)
    out_f32 = jax.block_until_ready(out_f32)
    np.testing.assert_allclose(np.asarray(out_f32), np.asarray(ref),
                               rtol=1e-4, atol=1e-3)

    # 2) Default bf16 streaming path (halves HBM bytes, f32 accumulation);
    #    compare against the reference evaluated on bf16-rounded inputs so the
    #    check isolates kernel correctness from input quantization.
    out_bf16 = qgcn_last_layer(A, x0, x1, w_left, b_left, w_right, b_right)
    out_bf16 = jax.block_until_ready(out_bf16)
    ref_q = qgcn_last_layer_ref(
        A.astype(jnp.bfloat16).astype(jnp.float32),
        x0.astype(jnp.bfloat16).astype(jnp.float32),
        x1.astype(jnp.bfloat16).astype(jnp.float32),
        w_left, b_left, w_right, b_right)
    np.testing.assert_allclose(np.asarray(out_bf16), np.asarray(ref_q),
                               rtol=3e-2, atol=5e-1)

    # 3) Multi-grid-step + padded-remainder path (B not a multiple of the tile).
    B2 = 20
    kA2, kx02, kx12 = jax.random.split(jax.random.PRNGKey(1), 3)
    A2 = jax.random.normal(kA2, (B2, N, N), dtype=jnp.float32)
    x02 = jax.random.normal(kx02, (B2, N, R), dtype=jnp.float32)
    x12 = jax.random.normal(kx12, (B2, N, L), dtype=jnp.float32)
    out2 = qgcn_last_layer(A2, x02, x12, w_left, b_left, w_right, b_right,
                           stream_dtype=jnp.float32, max_batch_tile=8)
    out2 = jax.block_until_ready(out2)
    ref2 = qgcn_last_layer_ref(A2, x02, x12, w_left, b_left, w_right, b_right)
    np.testing.assert_allclose(np.asarray(out2), np.asarray(ref2),
                               rtol=1e-4, atol=1e-3)

    print("KERNEL_OK")
</pallas_src>

<mosaic_0001>
module attributes {stable_mosaic.version = 11 : i64} {
  func.func @qgcn_last_layer_kernel(%arg0: i32, %arg1: memref<8x256xf32, #tpu.memory_space<vmem>>, %arg2: memref<8x192xf32, #tpu.memory_space<vmem>>, %arg3: memref<8x128xf32, #tpu.memory_space<vmem>>, %arg4: memref<128x256xf32, #tpu.memory_space<vmem>>, %arg5: memref<256x192xf32, #tpu.memory_space<vmem>>, %arg6: memref<192x6xf32, #tpu.memory_space<vmem>>, %arg7: memref<1x1xf32, #tpu.memory_space<smem>>, %arg8: memref<1x6xf32, #tpu.memory_space<vmem>>, %arg9: memref<8x6xf32, #tpu.memory_space<vmem>>) attributes {dimension_semantics = [#tpu.dimension_semantics<parallel>], iteration_bounds = array<i64: 1>, scalar_prefetch = 0 : i64, scratch_operands = 0 : i64, tpu.core_type = #tpu.core_type<tc>, window_params = [{transform_indices = @transform_0, window_bounds = array<i64: 8, 256>}, {transform_indices = @transform_1, window_bounds = array<i64: 8, 192>}, {transform_indices = @transform_2, window_bounds = array<i64: 8, 128>}, {pipeline_mode = #tpu.pipeline_mode<synchronous>, transform_indices = @transform_3, window_bounds = array<i64: 128, 256>}, {pipeline_mode = #tpu.pipeline_mode<synchronous>, transform_indices = @transform_4, window_bounds = array<i64: 256, 192>}, {pipeline_mode = #tpu.pipeline_mode<synchronous>, transform_indices = @transform_5, window_bounds = array<i64: 192, 6>}, {transform_indices = @transform_6, window_bounds = array<i64: 1, 1>}, {pipeline_mode = #tpu.pipeline_mode<synchronous>, transform_indices = @transform_7, window_bounds = array<i64: 1, 6>}, {transform_indices = @transform_8, window_bounds = array<i64: 8, 6>}]} {
    %c0 = arith.constant 0 : index
    %c0_0 = arith.constant 0 : index
    %0 = vector.load %arg3[%c0, %c0_0] : memref<8x128xf32, #tpu.memory_space<vmem>>, vector<8x128xf32>
    %c0_1 = arith.constant 0 : index
    %c0_2 = arith.constant 0 : index
    %1 = vector.load %arg4[%c0_1, %c0_2] : memref<128x256xf32, #tpu.memory_space<vmem>>, vector<128x256xf32>
    %cst = arith.constant dense<0.000000e+00> : vector<8x256xf32>
    %2 = tpu.matmul %0, %1, %cst {dimension_numbers = #tpu.dot_dimension_numbers<[1], [0], [0], [1], [0, 0, 1, 1], [], []>} : vector<8x128xf32>, vector<128x256xf32>, vector<8x256xf32> -> vector<8x256xf32>
    %c0_3 = arith.constant 0 : index
    %c0_4 = arith.constant 0 : index
    %3 = vector.load %arg1[%c0_3, %c0_4] : memref<8x256xf32, #tpu.memory_space<vmem>>, vector<8x256xf32>
    %4 = arith.mulf %3, %2 : vector<8x256xf32>
    %c0_5 = arith.constant 0 : index
    %c0_6 = arith.constant 0 : index
    %5 = vector.load %arg5[%c0_5, %c0_6] : memref<256x192xf32, #tpu.memory_space<vmem>>, vector<256x192xf32>
    %cst_7 = arith.constant dense<0.000000e+00> : vector<8x192xf32>
    %6 = tpu.matmul %4, %5, %cst_7 {dimension_numbers = #tpu.dot_dimension_numbers<[1], [0], [0], [1], [0, 0, 1, 1], [], []>} : vector<8x256xf32>, vector<256x192xf32>, vector<8x192xf32> -> vector<8x192xf32>
    %c0_8 = arith.constant 0 : index
    %c0_9 = arith.constant 0 : index
    %7 = memref.load %arg7[%c0_8, %c0_9] : memref<1x1xf32, #tpu.memory_space<smem>>
    %8 = vector.broadcast %7 : f32 to vector<8x192xf32>
    %9 = arith.addf %6, %8 : vector<8x192xf32>
    %c0_10 = arith.constant 0 : index
    %c0_11 = arith.constant 0 : index
    %10 = vector.load %arg2[%c0_10, %c0_11] : memref<8x192xf32, #tpu.memory_space<vmem>>, vector<8x192xf32>
    %11 = arith.mulf %10, %9 : vector<8x192xf32>
    %c0_12 = arith.constant 0 : index
    %c0_13 = arith.constant 0 : index
    %12 = vector.load %arg6[%c0_12, %c0_13] : memref<192x6xf32, #tpu.memory_space<vmem>>, vector<192x6xf32>
    %cst_14 = arith.constant dense<0.000000e+00> : vector<8x6xf32>
    %13 = tpu.matmul %11, %12, %cst_14 {dimension_numbers = #tpu.dot_dimension_numbers<[1], [0], [0], [1], [0, 0, 1, 1], [], []>} : vector<8x192xf32>, vector<192x6xf32>, vector<8x6xf32> -> vector<8x6xf32>
    %c0_15 = arith.constant 0 : index
    %c0_16 = arith.constant 0 : index
    %14 = vector.load %arg8[%c0_15, %c0_16] : memref<1x6xf32, #tpu.memory_space<vmem>>, vector<1x6xf32>
    %15 = vector.broadcast %14 : vector<1x6xf32> to vector<8x6xf32>
    %16 = arith.addf %13, %15 : vector<8x6xf32>
    %c0_17 = arith.constant 0 : index
    %c0_18 = arith.constant 0 : index
    %17 = vector.load %arg9[%c0_17, %c0_18] : memref<8x6xf32, #tpu.memory_space<vmem>>, vector<8x6xf32>
    tpu.vector_store %arg9[%c0_17, %c0_18], %16 {strides = array<i32>} : memref<8x6xf32, #tpu.memory_space<vmem>>, vector<8x6xf32>,
    return
  }
  func.func @transform_0(%arg0: i32) -> (i32, i32) {
    %c0_i32 = arith.constant 0 : i32
    %c0_i32_0 = arith.constant 0 : i32
    return %arg0, %c0_i32 : i32, i32
  }
  func.func @transform_1(%arg0: i32) -> (i32, i32) {
    %c0_i32 = arith.constant 0 : i32
    %c0_i32_0 = arith.constant 0 : i32
    return %arg0, %c0_i32 : i32, i32
  }
  func.func @transform_2(%arg0: i32) -> (i32, i32) {
    %c0_i32 = arith.constant 0 : i32
    %c0_i32_0 = arith.constant 0 : i32
    return %arg0, %c0_i32 : i32, i32
  }
  func.func @transform_3(%arg0: i32) -> (i32, i32) {
    %c0_i32 = arith.constant 0 : i32
    %c0_i32_0 = arith.constant 0 : i32
    %c0_i32_1 = arith.constant 0 : i32
    return %c0_i32, %c0_i32_0 : i32, i32
  }
  func.func @transform_4(%arg0: i32) -> (i32, i32) {
    %c0_i32 = arith.constant 0 : i32
    %c0_i32_0 = arith.constant 0 : i32
    %c0_i32_1 = arith.constant 0 : i32
    return %c0_i32, %c0_i32_0 : i32, i32
  }
  func.func @transform_5(%arg0: i32) -> (i32, i32) {
    %c0_i32 = arith.constant 0 : i32
    %c0_i32_0 = arith.constant 0 : i32
    %c0_i32_1 = arith.constant 0 : i32
    return %c0_i32, %c0_i32_0 : i32, i32
  }
  func.func @transform_6(%arg0: i32) -> (i32, i32) {
    %c0_i32 = arith.constant 0 : i32
    %c0_i32_0 = arith.constant 0 : i32
    %c0_i32_1 = arith.constant 0 : i32
    return %c0_i32, %c0_i32_0 : i32, i32
  }
  func.func @transform_7(%arg0: i32) -> (i32, i32) {
    %c0_i32 = arith.constant 0 : i32
    %c0_i32_0 = arith.constant 0 : i32
    %c0_i32_1 = arith.constant 0 : i32
    return %c0_i32, %c0_i32_0 : i32, i32
  }
  func.func @transform_8(%arg0: i32) -> (i32, i32) {
    %c0_i32 = arith.constant 0 : i32
    %c0_i32_0 = arith.constant 0 : i32
    return %arg0, %c0_i32 : i32, i32
  }
}

</mosaic_0001>

<llo_original>
// kernel: tpu_custom_call.1
$region0: #{tpu_custom_call.1}
  #allocation0 [shape = 'u32[]', space=smem, size = 0x4, offset = 0x4, fixed_abs, tag = 'smem constant byte address 0x4 - core index']
  #allocation1 [shape = 'u32[144,128]{1,0:T(1,128)}', space=vmem, size = 0x12000, scoped, tag = 'internal scratch']
  #allocation2 [shape = 'f32[1,1]{1,0:T(1,128)S(6)}', space=smem, size = 0x200, scoped, tag = 'scoped memory for tpu_custom_call.1']
  %s0 = inlined_call_operand.vmem [shape: f32[8,256], index: 0, kind: input, shape index: {}]
  %s1 = inlined_call_operand.vmem [shape: f32[8,192], index: 1, kind: input, shape index: {}]
  %s2 = inlined_call_operand.vmem [shape: f32[8,128], index: 2, kind: input, shape index: {}]
  %s3 = inlined_call_operand.vmem [shape: f32[128,256], index: 3, kind: input, shape index: {}]
  %s4 = inlined_call_operand.vmem [shape: f32[256,192], index: 4, kind: input, shape index: {}]
  %s5 = inlined_call_operand.vmem [shape: f32[192,6], index: 5, kind: input, shape index: {}]
  %s6 = inlined_call_operand.<no memory space> [shape: f32[1,1], index: 6, kind: input, shape index: {}]
  %s7 = inlined_call_operand.vmem [shape: f32[1,6], index: 7, kind: input, shape index: {}]
  %s8 = inlined_call_operand.hbm [shape: f32[8,6], index: 8, kind: output, shape index: {}]
  %s9 = sld [smem:[#allocation0]]
  $region42: #{tpu_custom_call.1} parent=0
    _
  %s11 = ssub.s32 1, %s9
  %s12 = scalar_select 0, %s11, %s9
  %13 = sst [smem:[#allocation2]] %s6
  $region1: #{tpu_custom_call.1} parent=0
    #allocation3 [shape = 'u8[4096]{0}', space=vmem, size = 0x1000, scoped, tag = 'output window, operand 0, single buffered']
    #allocation4 [shape = 's32[1]{0}', space=sflag, size = 0x4, scoped, tag = 'scoped memory for tpu_custom_call.1']
    %14 = vsyncpa [#allocation4], 0
    // Predicated region
    $region2: #{tpu_custom_call.1} parent=1 // pred_check
      _
    $region3: #{tpu_custom_call.1} parent=1 // pred_check_branch
      %16 = sbr.rel (0) target = $region5
    $region4: #{tpu_custom_call.1} parent=1 // pred_region
      _
    $region5: #{tpu_custom_call.1} parent=1 // pred_fallthru
      _
    // Predicated region
    $region6: #{tpu_custom_call.1} parent=1 // pred_check
      _
    $region7: #{tpu_custom_call.1} parent=1 // pred_check_branch
      %18 = sbr.rel (0) target = $region9
    $region8: #{tpu_custom_call.1} parent=1 // pred_region
      _
    $region9: #{tpu_custom_call.1} parent=1 // pred_fallthru
      _
    // Predicated region
    $region10: #{tpu_custom_call.1} parent=1 // pred_check
      _
    $region11: #{tpu_custom_call.1} parent=1 // pred_check_branch
      %20 = sbr.rel (0) target = $region13
    $region12: #{tpu_custom_call.1} parent=1 // pred_region
      _
    $region13: #{tpu_custom_call.1} parent=1 // pred_fallthru
      _
    // Predicated region
    $region14: #{tpu_custom_call.1} parent=1 // pred_check
      _
    $region15: #{tpu_custom_call.1} parent=1 // pred_check_branch
      %22 = sbr.rel (0) target = $region17
    $region16: #{tpu_custom_call.1} parent=1 // pred_region
      _
    $region17: #{tpu_custom_call.1} parent=1 // pred_fallthru
      _
    // Predicated region
    $region18: #{tpu_custom_call.1} parent=1 // pred_check
      _
    $region19: #{tpu_custom_call.1} parent=1 // pred_check_branch
      %24 = sbr.rel (0) target = $region21
    $region20: #{tpu_custom_call.1} parent=1 // pred_region
      _
    $region21: #{tpu_custom_call.1} parent=1 // pred_fallthru
      _
    // Predicated region
    $region22: #{tpu_custom_call.1} parent=1 // pred_check
      _
    $region23: #{tpu_custom_call.1} parent=1 // pred_check_branch
      %26 = sbr.rel (0) target = $region25
    $region24: #{tpu_custom_call.1} parent=1 // pred_region
      _
    $region25: #{tpu_custom_call.1} parent=1 // pred_fallthru
      _
    // Predicated region
    $region26: #{tpu_custom_call.1} parent=1 // pred_check
      _
    $region27: #{tpu_custom_call.1} parent=1 // pred_check_branch
      %28 = sbr.rel (0) target = $region29
    $region28: #{tpu_custom_call.1} parent=1 // pred_region
      _
    $region29: #{tpu_custom_call.1} parent=1 // pred_fallthru
      _
    // Predicated region
    $region30: #{tpu_custom_call.1} parent=1 // pred_check
      _
    $region31: #{tpu_custom_call.1} parent=1 // pred_check_branch
      %30 = sbr.rel (0) target = $region33
    $region32: #{tpu_custom_call.1} parent=1 // pred_region
      _
    $region33: #{tpu_custom_call.1} parent=1 // pred_fallthru
      _
    %v31 = vld [vmem:[%s2] sm:$0xff]
    %v32 = vld [vmem:[%s3] sm:$0xff]
    %v33 = vld [vmem:[%s3 + $0x8] sm:$0xff]
    %v34 = vld [vmem:[%s3 + $0x10] sm:$0xff]
    %v35 = vld [vmem:[%s3 + $0x18] sm:$0xff]
    %v36 = vld [vmem:[%s3 + $0x20] sm:$0xff]
    %v37 = vld [vmem:[%s3 + $0x28] sm:$0xff]
    %v38 = vld [vmem:[%s3 + $0x30] sm:$0xff]
    %v39 = vld [vmem:[%s3 + $0x38] sm:$0xff]
    %v40 = vld [vmem:[%s3 + $0x40] sm:$0xff]
    %v41 = vld [vmem:[%s3 + $0x48] sm:$0xff]
    %v42 = vld [vmem:[%s3 + $0x50] sm:$0xff]
    %v43 = vld [vmem:[%s3 + $0x58] sm:$0xff]
    %v44 = vld [vmem:[%s3 + $0x60] sm:$0xff]
    %v45 = vld [vmem:[%s3 + $0x68] sm:$0xff]
    %v46 = vld [vmem:[%s3 + $0x70] sm:$0xff]
    %v47 = vld [vmem:[%s3 + $0x78] sm:$0xff]
    %v48 = vld [vmem:[%s3 + $0x80] sm:$0xff]
    %v49 = vld [vmem:[%s3 + $0x88] sm:$0xff]
    %v50 = vld [vmem:[%s3 + $0x90] sm:$0xff]
    %v51 = vld [vmem:[%s3 + $0x98] sm:$0xff]
    %v52 = vld [vmem:[%s3 + $0xa0] sm:$0xff]
    %v53 = vld [vmem:[%s3 + $0xa8] sm:$0xff]
    %v54 = vld [vmem:[%s3 + $0xb0] sm:$0xff]
    %v55 = vld [vmem:[%s3 + $0xb8] sm:$0xff]
    %v56 = vld [vmem:[%s3 + $0xc0] sm:$0xff]
    %v57 = vld [vmem:[%s3 + $0xc8] sm:$0xff]
    %v58 = vld [vmem:[%s3 + $0xd0] sm:$0xff]
    %v59 = vld [vmem:[%s3 + $0xd8] sm:$0xff]
    %v60 = vld [vmem:[%s3 + $0xe0] sm:$0xff]
    %v61 = vld [vmem:[%s3 + $0xe8] sm:$0xff]
    %v62 = vld [vmem:[%s3 + $0xf0] sm:$0xff]
    %v63 = vld [vmem:[%s3 + $0xf8] sm:$0xff]
    %64 = vmatprep.subr.mxu0 %v33
    %65 = vmatpush1.msra.mxu0 %v32
    %66 = vmatprep.subr.mxu0 %v35
    %67 = vmatpush1.msra.mxu0 %v34
    %68 = vmatprep.subr.mxu0 %v37
    %69 = vmatpush1.msra.mxu0 %v36
    %70 = vmatprep.subr.mxu0 %v39
    %71 = vmatpush1.msra.mxu0 %v38
    %72 = vmatprep.subr.mxu0 %v41
    %73 = vmatpush1.msra.mxu0 %v40
    %74 = vmatprep.subr.mxu0 %v43
    %75 = vmatpush1.msra.mxu0 %v42
    %76 = vmatprep.subr.mxu0 %v45
    %77 = vmatpush1.msra.mxu0 %v44
    %78 = vmatprep.subr.mxu0 %v47
    %79 = vmatpush1.msra.mxu0 %v46
    %80 = vmatprep.subr.mxu0 %v49
    %81 = vmatpush1.msra.mxu0 %v48
    %82 = vmatprep.subr.mxu0 %v51
    %83 = vmatpush1.msra.mxu0 %v50
    %84 = vmatprep.subr.mxu0 %v53
    %85 = vmatpush1.msra.mxu0 %v52
    %86 = vmatprep.subr.mxu0 %v55
    %87 = vmatpush1.msra.mxu0 %v54
    %88 = vmatprep.subr.mxu0 %v57
    %89 = vmatpush1.msra.mxu0 %v56
    %90 = vmatprep.subr.mxu0 %v59
    %91 = vmatpush1.msra.mxu0 %v58
    %92 = vmatprep.subr.mxu0 %v61
    %93 = vmatpush1.msra.mxu0 %v60
    %94 = vmatprep.subr.mxu0 %v63
    %95 = vmatpush1.msra.mxu0 %v62
    %96 = vmatprep.subr.mxu0 0.0
    %97 = vmatpush1.msra.mxu0 0.0
    %98 = vmatprep.subr.mxu0 0.0
    %99 = vmatpush1.msra.mxu0 0.0
    %100 = vmatprep.subr.mxu0 0.0
    %101 = vmatpush1.msra.mxu0 0.0
    %102 = vmatprep.subr.mxu0 0.0
    %103 = vmatpush1.msra.mxu0 0.0
    %104 = vmatprep.subr.mxu0 0.0
    %105 = vmatpush1.msra.mxu0 0.0
    %106 = vmatprep.subr.mxu0 0.0
    %107 = vmatpush1.msra.mxu0 0.0
    %108 = vmatprep.subr.mxu0 0.0
    %109 = vmatpush1.msra.mxu0 0.0
    %110 = vmatprep.subr.mxu0 0.0
    %111 = vmatpush1.msra.mxu0 0.0
    %112 = vmatprep.subr.mxu0 0.0
    %113 = vmatpush1.msra.mxu0 0.0
    %114 = vmatprep.subr.mxu0 0.0
    %115 = vmatpush1.msra.mxu0 0.0
    %116 = vmatprep.subr.mxu0 0.0
    %117 = vmatpush1.msra.mxu0 0.0
    %118 = vmatprep.subr.mxu0 0.0
    %119 = vmatpush1.msra.mxu0 0.0
    %120 = vmatprep.subr.mxu0 0.0
    %121 = vmatpush1.msra.mxu0 0.0
    %122 = vmatprep.subr.mxu0 0.0
    %123 = vmatpush1.msra.mxu0 0.0
    %124 = vmatprep.subr.mxu0 0.0
    %125 = vmatpush1.msra.mxu0 0.0
    %126 = vmatprep.subr.mxu0 0.0
    %127 = vmatpush1.msra.mxu0 0.0
    %128 = vmatprep.mubr.f32.mxu0 0.0
    %129 = vmatmul.mubr.f32.gmra.mrb[0].mxu0 %v31
    %v130 = vpop.f32.mrb[0].mxu0
    %v131 = vadd.f32 0.0, %v130
    %v132 = vpop.f32.mrb[0].mxu0
    %v133 = vadd.f32 0.0, %v132
    %134 = vdwg.mxu0
    %v135 = vld [vmem:[%s0] sm:$0xff]
    %v136 = vld [vmem:[%s0 + $0x8] sm:$0xff]
    %v137 = vmul.f32 %v135, %v131
    %v138 = vmul.f32 %v136, %v133
    %v139 = vld [vmem:[%s4] sm:$0xff]
    %v140 = vld [vmem:[%s4 + $0x8] sm:$0xff]
    %v141 = vld [vmem:[%s4 + $0x10] sm:$0xff]
    %v142 = vld [vmem:[%s4 + $0x18] sm:$0xff]
    %v143 = vld [vmem:[%s4 + $0x20] sm:$0xff]
    %v144 = vld [vmem:[%s4 + $0x28] sm:$0xff]
    %v145 = vld [vmem:[%s4 + $0x30] sm:$0xff]
    %v146 = vld [vmem:[%s4 + $0x38] sm:$0xff]
    %v147 = vld [vmem:[%s4 + $0x40] sm:$0xff]
    %v148 = vld [vmem:[%s4 + $0x48] sm:$0xff]
    %v149 = vld [vmem:[%s4 + $0x50] sm:$0xff]
    %v150 = vld [vmem:[%s4 + $0x58] sm:$0xff]
    %v151 = vld [vmem:[%s4 + $0x60] sm:$0xff]
    %v152 = vld [vmem:[%s4 + $0x68] sm:$0xff]
    %v153 = vld [vmem:[%s4 + $0x70] sm:$0xff]
    %v154 = vld [vmem:[%s4 + $0x78] sm:$0xff]
    %v155 = vld [vmem:[%s4 + $0x80] sm:$0xff]
    %v156 = vld [vmem:[%s4 + $0x88] sm:$0xff]
    %v157 = vld [vmem:[%s4 + $0x90] sm:$0xff]
    %v158 = vld [vmem:[%s4 + $0x98] sm:$0xff]
    %v159 = vld [vmem:[%s4 + $0xa0] sm:$0xff]
    %v160 = vld [vmem:[%s4 + $0xa8] sm:$0xff]
    %v161 = vld [vmem:[%s4 + $0xb0] sm:$0xff]
    %v162 = vld [vmem:[%s4 + $0xb8] sm:$0xff]
    %v163 = vld [vmem:[%s4 + $0xc0] sm:$0xff]
    %v164 = vld [vmem:[%s4 + $0xc8] sm:$0xff]
    %v165 = vld [vmem:[%s4 + $0xd0] sm:$0xff]
    %v166 = vld [vmem:[%s4 + $0xd8] sm:$0xff]
    %v167 = vld [vmem:[%s4 + $0xe0] sm:$0xff]
    %v168 = vld [vmem:[%s4 + $0xe8] sm:$0xff]
    %v169 = vld [vmem:[%s4 + $0xf0] sm:$0xff]
    %v170 = vld [vmem:[%s4 + $0xf8] sm:$0xff]
    %v171 = vld [vmem:[%s4 + $0x100] sm:$0xff]
    %v172 = vld [vmem:[%s4 + $0x108] sm:$0xff]
    %v173 = vld [vmem:[%s4 + $0x110] sm:$0xff]
    %v174 = vld [vmem:[%s4 + $0x118] sm:$0xff]
    %v175 = vld [vmem:[%s4 + $0x120] sm:$0xff]
    %v176 = vld [vmem:[%s4 + $0x128] sm:$0xff]
    %v177 = vld [vmem:[%s4 + $0x130] sm:$0xff]
    %v178 = vld [vmem:[%s4 + $0x138] sm:$0xff]
    %v179 = vld [vmem:[%s4 + $0x140] sm:$0xff]
    %v180 = vld [vmem:[%s4 + $0x148] sm:$0xff]
    %v181 = vld [vmem:[%s4 + $0x150] sm:$0xff]
    %v182 = vld [vmem:[%s4 + $0x158] sm:$0xff]
    %v183 = vld [vmem:[%s4 + $0x160] sm:$0xff]
    %v184 = vld [vmem:[%s4 + $0x168] sm:$0xff]
    %v185 = vld [vmem:[%s4 + $0x170] sm:$0xff]
    %v186 = vld [vmem:[%s4 + $0x178] sm:$0xff]
    %v187 = vld [vmem:[%s4 + $0x180] sm:$0xff]
    %v188 = vld [vmem:[%s4 + $0x188] sm:$0xff]
    %v189 = vld [vmem:[%s4 + $0x190] sm:$0xff]
    %v190 = vld [vmem:[%s4 + $0x198] sm:$0xff]
    %v191 = vld [vmem:[%s4 + $0x1a0] sm:$0xff]
    %v192 = vld [vmem:[%s4 + $0x1a8] sm:$0xff]
    %v193 = vld [vmem:[%s4 + $0x1b0] sm:$0xff]
    %v194 = vld [vmem:[%s4 + $0x1b8] sm:$0xff]
    %v195 = vld [vmem:[%s4 + $0x1c0] sm:$0xff]
    %v196 = vld [vmem:[%s4 + $0x1c8] sm:$0xff]
    %v197 = vld [vmem:[%s4 + $0x1d0] sm:$0xff]
    %v198 = vld [vmem:[%s4 + $0x1d8] sm:$0xff]
    %v199 = vld [vmem:[%s4 + $0x1e0] sm:$0xff]
    %v200 = vld [vmem:[%s4 + $0x1e8] sm:$0xff]
    %v201 = vld [vmem:[%s4 + $0x1f0] sm:$0xff]
    %v202 = vld [vmem:[%s4 + $0x1f8] sm:$0xff]
    %s203 = sld [smem:[#allocation2]]
    %v204 = vstv %s203
    %205 = vmatprep.subr.mxu0 %v140
    %206 = vmatpush1.msra.mxu0 %v139
    %207 = vmatprep.subr.mxu0 %v142
    %208 = vmatpush1.msra.mxu0 %v141
    %209 = vmatprep.subr.mxu0 %v144
    %210 = vmatpush1.msra.mxu0 %v143
    %211 = vmatprep.subr.mxu0 %v146
    %212 = vmatpush1.msra.mxu0 %v145
    %213 = vmatprep.subr.mxu0 %v148
    %214 = vmatpush1.msra.mxu0 %v147
    %215 = vmatprep.subr.mxu0 %v150
    %216 = vmatpush1.msra.mxu0 %v149
    %217 = vmatprep.subr.mxu0 %v152
    %218 = vmatpush1.msra.mxu0 %v151
    %219 = vmatprep.subr.mxu0 %v154
    %220 = vmatpush1.msra.mxu0 %v153
    %221 = vmatprep.subr.mxu0 %v156
    %222 = vmatpush1.msra.mxu0 %v155
    %223 = vmatprep.subr.mxu0 %v158
    %224 = vmatpush1.msra.mxu0 %v157
    %225 = vmatprep.subr.mxu0 %v160
    %226 = vmatpush1.msra.mxu0 %v159
    %227 = vmatprep.subr.mxu0 %v162
    %228 = vmatpush1.msra.mxu0 %v161
    %229 = vmatprep.subr.mxu0 %v164
    %230 = vmatpush1.msra.mxu0 %v163
    %231 = vmatprep.subr.mxu0 %v166
    %232 = vmatpush1.msra.mxu0 %v165
    %233 = vmatprep.subr.mxu0 %v168
    %234 = vmatpush1.msra.mxu0 %v167
    %235 = vmatprep.subr.mxu0 %v170
    %236 = vmatpush1.msra.mxu0 %v169
    %237 = vmatprep.subr.mxu0 %v172
    %238 = vmatpush1.msra.mxu0 %v171
    %239 = vmatprep.subr.mxu0 %v174
    %240 = vmatpush1.msra.mxu0 %v173
    %241 = vmatprep.subr.mxu0 %v176
    %242 = vmatpush1.msra.mxu0 %v175
    %243 = vmatprep.subr.mxu0 %v178
    %244 = vmatpush1.msra.mxu0 %v177
    %245 = vmatprep.subr.mxu0 %v180
    %246 = vmatpush1.msra.mxu0 %v179
    %247 = vmatprep.subr.mxu0 %v182
    %248 = vmatpush1.msra.mxu0 %v181
    %249 = vmatprep.subr.mxu0 %v184
    %250 = vmatpush1.msra.mxu0 %v183
    %251 = vmatprep.subr.mxu0 %v186
    %252 = vmatpush1.msra.mxu0 %v185
    %253 = vmatprep.subr.mxu0 %v188
    %254 = vmatpush1.msra.mxu0 %v187
    %255 = vmatprep.subr.mxu0 %v190
    %256 = vmatpush1.msra.mxu0 %v189
    %257 = vmatprep.subr.mxu0 %v192
    %258 = vmatpush1.msra.mxu0 %v191
    %259 = vmatprep.subr.mxu0 %v194
    %260 = vmatpush1.msra.mxu0 %v193
    %261 = vmatprep.subr.mxu0 %v196
    %262 = vmatpush1.msra.mxu0 %v195
    %263 = vmatprep.subr.mxu0 %v198
    %264 = vmatpush1.msra.mxu0 %v197
    %265 = vmatprep.subr.mxu0 %v200
    %266 = vmatpush1.msra.mxu0 %v199
    %267 = vmatprep.subr.mxu0 %v202
    %268 = vmatpush1.msra.mxu0 %v201
    %269 = vmatprep.mubr.f32.mxu0 %v138
    %270 = vmatmul.mubr.f32.gmra.mrb[0].mxu0 %v137
    %v271 = vpop.f32.mrb[0].mxu0
    %v272 = vadd.f32 %v204, %v271
    %v273 = vpop.f32.mrb[0].mxu0
    %v274 = vadd.f32 %v204, %v273
    %275 = vdwg.mxu0
    %v276 = vld [vmem:[%s1] sm:$0xff]
    %v277 = vld [vmem:[%s1 + $0x8] sm:$0xff]
    %v278 = vmul.f32 %v276, %v272
    %v279 = vmul.f32 %v277, %v274
    %v280 = vld [vmem:[%s5] sm:$0xff]
    %v281 = vld [vmem:[%s5 + $0x8] sm:$0xff]
    %v282 = vld [vmem:[%s5 + $0x10] sm:$0xff]
    %v283 = vld [vmem:[%s5 + $0x18] sm:$0xff]
    %v284 = vld [vmem:[%s5 + $0x20] sm:$0xff]
    %v285 = vld [vmem:[%s5 + $0x28] sm:$0xff]
    %v286 = vld [vmem:[%s5 + $0x30] sm:$0xff]
    %v287 = vld [vmem:[%s5 + $0x38] sm:$0xff]
    %v288 = vld [vmem:[%s5 + $0x40] sm:$0xff]
    %v289 = vld [vmem:[%s5 + $0x48] sm:$0xff]
    %v290 = vld [vmem:[%s5 + $0x50] sm:$0xff]
    %v291 = vld [vmem:[%s5 + $0x58] sm:$0xff]
    %v292 = vld [vmem:[%s5 + $0x60] sm:$0xff]
    %v293 = vld [vmem:[%s5 + $0x68] sm:$0xff]
    %v294 = vld [vmem:[%s5 + $0x70] sm:$0xff]
    %v295 = vld [vmem:[%s5 + $0x78] sm:$0xff]
    %v296 = vld [vmem:[%s5 + $0x80] sm:$0xff]
    %v297 = vld [vmem:[%s5 + $0x88] sm:$0xff]
    %v298 = vld [vmem:[%s5 + $0x90] sm:$0xff]
    %v299 = vld [vmem:[%s5 + $0x98] sm:$0xff]
    %v300 = vld [vmem:[%s5 + $0xa0] sm:$0xff]
    %v301 = vld [vmem:[%s5 + $0xa8] sm:$0xff]
    %v302 = vld [vmem:[%s5 + $0xb0] sm:$0xff]
    %v303 = vld [vmem:[%s5 + $0xb8] sm:$0xff]
    %v304 = vld [vmem:[%s7] sm:$0x1]
    %v306 = vlaneseq
    %v307 = vshrl.u32 %v306, 7
    %v308 = vsub.s32 0, %v307
    %v309 = vrot.slane %v304, %v308
    %vm311 = vcmask 523264
    %v313 = vsel %vm311, %v279, 0
    %315 = vmatprep.subr.mxu0 0.0
    %316 = vmatpush1.msra.mxu0 %v280
    %317 = vmatprep.subr.mxu0 0.0
    %318 = vmatpush1.msra.mxu0 %v281
    %319 = vmatprep.subr.mxu0 0.0
    %320 = vmatpush1.msra.mxu0 %v282
    %321 = vmatprep.subr.mxu0 0.0
    %322 = vmatpush1.msra.mxu0 %v283
    %323 = vmatprep.subr.mxu0 0.0
    %324 = vmatpush1.msra.mxu0 %v284
    %325 = vmatprep.subr.mxu0 0.0
    %326 = vmatpush1.msra.mxu0 %v285
    %327 = vmatprep.subr.mxu0 0.0
    %328 = vmatpush1.msra.mxu0 %v286
    %329 = vmatprep.subr.mxu0 0.0
    %330 = vmatpush1.msra.mxu0 %v287
    %331 = vmatprep.subr.mxu0 0.0
    %332 = vmatpush1.msra.mxu0 %v288
    %333 = vmatprep.subr.mxu0 0.0
    %334 = vmatpush1.msra.mxu0 %v289
    %335 = vmatprep.subr.mxu0 0.0
    %336 = vmatpush1.msra.mxu0 %v290
    %337 = vmatprep.subr.mxu0 0.0
    %338 = vmatpush1.msra.mxu0 %v291
    %339 = vmatprep.subr.mxu0 0.0
    %340 = vmatpush1.msra.mxu0 %v292
    %341 = vmatprep.subr.mxu0 0.0
    %342 = vmatpush1.msra.mxu0 %v293
    %343 = vmatprep.subr.mxu0 0.0
    %344 = vmatpush1.msra.mxu0 %v294
    %345 = vmatprep.subr.mxu0 0.0
    %346 = vmatpush1.msra.mxu0 %v295
    %347 = vmatprep.subr.mxu0 0.0
    %348 = vmatpush1.msra.mxu0 %v296
    %349 = vmatprep.subr.mxu0 0.0
    %350 = vmatpush1.msra.mxu0 %v297
    %351 = vmatprep.subr.mxu0 0.0
    %352 = vmatpush1.msra.mxu0 %v298
    %353 = vmatprep.subr.mxu0 0.0
    %354 = vmatpush1.msra.mxu0 %v299
    %355 = vmatprep.subr.mxu0 0.0
    %356 = vmatpush1.msra.mxu0 %v300
    %357 = vmatprep.subr.mxu0 0.0
    %358 = vmatpush1.msra.mxu0 %v301
    %359 = vmatprep.subr.mxu0 0.0
    %360 = vmatpush1.msra.mxu0 %v302
    %361 = vmatprep.subr.mxu0 0.0
    %362 = vmatpush1.msra.mxu0 %v303
    %363 = vmatprep.subr.mxu0 0.0
    %364 = vmatpush1.msra.mxu0 0.0
    %365 = vmatprep.subr.mxu0 0.0
    %366 = vmatpush1.msra.mxu0 0.0
    %367 = vmatprep.subr.mxu0 0.0
    %368 = vmatpush1.msra.mxu0 0.0
    %369 = vmatprep.subr.mxu0 0.0
    %370 = vmatpush1.msra.mxu0 0.0
    %371 = vmatprep.subr.mxu0 0.0
    %372 = vmatpush1.msra.mxu0 0.0
    %373 = vmatprep.subr.mxu0 0.0
    %374 = vmatpush1.msra.mxu0 0.0
    %375 = vmatprep.subr.mxu0 0.0
    %376 = vmatpush1.msra.mxu0 0.0
    %377 = vmatprep.subr.mxu0 0.0
    %378 = vmatpush1.msra.mxu0 0.0
    %379 = vmatprep.mubr.f32.mxu0 %v313
    %380 = vmatmul.mubr.f32.gmra.mrb[0].mxu0 %v278
    %v381 = vpop.f32.mrb[0].mxu0
    %v382 = vadd.f32 %v309, %v381
    %v383 = vpop.f32.mrb[0].mxu0
    %384 = vdwg.mxu0
    %vm385 = vcmask 48128
    %386 = vst.msk [vmem:[#allocation3] sm:$0xff] %vm385, %v382
    // Predicated region
    $region34: #{tpu_custom_call.1} parent=1 // pred_check
      _
    $region35: #{tpu_custom_call.1} parent=1 // pred_check_branch
      %388 = sbr.rel (0) target = $region37
    $region36: #{tpu_custom_call.1} parent=1 // pred_region
      %s390 = ssub.s32 128, 128
      %391 = vsyncadd [#allocation4], %s390
      %s393 = sshll.u32 [#allocation3], 4
      %s394 = int_to_ptr.vmem [resolvable:$true] %s393
      %396 = dma.vmem_to_hbm [thread:$0]  %s394, 128, %s8, [#allocation4]
    $region37: #{tpu_custom_call.1} parent=1 // pred_fallthru
      _
    // Predicated region
    $region38: #{tpu_custom_call.1} parent=1 // pred_check
      _
    $region39: #{tpu_custom_call.1} parent=1 // pred_check_branch
      %398 = sbr.rel (0) target = $region41
    $region40: #{tpu_custom_call.1} parent=1 // pred_region
      %399 = dma.done [#allocation4], 128
    $region41: #{tpu_custom_call.1} parent=1 // pred_fallthru
      _
    %400 = vsyncpa [#allocation4], 1

</llo_original>
